<compile_context>
chip_gen: v7x
topology: tpu7x:2x2x1
jax: 0.10.0
libtpu: 0.0.40
codegen_flags: <defaults>
</compile_context>

<pallas_src>
import jax
import jax.numpy as jnp
from jax import lax
from jax.experimental import pallas as pl
from jax.experimental.pallas import tpu as pltpu

IN_FEATURES = 24   # len(FEATURES)
H1 = 32
H2 = 16
OUT = 2

DEFAULT_BLOCK_BATCH = 16384  # rows per grid step (multiple of 128); sweep 8K-32K


def _round_up(n: int, m: int) -> int:
    return ((n + m - 1) // m) * m


def _choose_tile_rows(padded_rows: int, block_batch: int) -> int:
    """Largest multiple-of-128 tile that divides padded_rows, <= block_batch,
    and (when possible) leaves >= 2 grid steps for v7x megacore sharding."""
    m = padded_rows // 128
    cap = max(1, min(m, block_batch // 128))
    if m >= 2:
        cap = min(cap, max(1, m // 2))  # keep >= 2 grid steps when batch allows
    for c in range(cap, 0, -1):
        if m % c == 0:
            return 128 * c
    return 128


def mlp_kernel(x_ref, w1_ref, b1_ref, w2_ref, b2_ref, w3_ref, b3_ref, o_ref):
    # x_ref: (TB, IN_FEATURES) -- native row-major tile, one contiguous DMA.
    x = x_ref[...]

    # Layer 1: contract the feature axis of w1 (H1, 24) with the feature axis
    # of x (TB, 24)  ->  (H1, TB).  A @ B^T form: Mosaic folds the transpose
    # into the MXU pass; batch lands on the 128-lane axis (lane dense).
    h1 = lax.dot_general(
        w1_ref[...], x,
        dimension_numbers=(((1,), (1,)), ((), ())),
        preferred_element_type=jnp.float32,
    ) + b1_ref[...]
    h1 = jnp.maximum(h1, 0.0)

    # Layer 2: (16, 32) @ (32, TB) -> (16, TB).
    h2 = jnp.dot(w2_ref[...], h1, preferred_element_type=jnp.float32) + b2_ref[...]
    h2 = jnp.maximum(h2, 0.0)

    # Layer 3: (2, 16) @ (16, TB) -> (2, TB), then exact sigmoid
    # (exp runs on the EUP; the divide over 2 rows is negligible VALU work).
    z = jnp.dot(w3_ref[...], h2, preferred_element_type=jnp.float32) + b3_ref[...]
    o_ref[...] = (1.0 / (1.0 + jnp.exp(-z))).astype(o_ref.dtype)


def mlp_forward(x, params, *, block_batch: int = DEFAULT_BLOCK_BATCH):
    """x: [batch, IN_FEATURES] float32 (PyTorch layout). Returns [batch, OUT]."""
    w1, b1, w2, b2, w3, b3 = params  # w: [out, in], b: [out, 1]
    batch = x.shape[0]

    # Pad only to a multiple of 128 (usually a no-op); keep the native layout.
    padded = _round_up(batch, 128)
    if padded != batch:
        x = jnp.pad(x, ((0, padded - batch), (0, 0)))

    tb = _choose_tile_rows(padded, block_batch)
    grid = (padded // tb,)

    # Advisory cost hint for XLA's scheduler.
    flops = 2 * padded * (IN_FEATURES * H1 + H1 * H2 + H2 * OUT)
    bytes_accessed = 4 * (
        padded * IN_FEATURES + padded * OUT
        + H1 * IN_FEATURES + H1 + H2 * H1 + H2 + OUT * H2 + OUT
    )
    cost = pl.CostEstimate(
        flops=flops,
        transcendentals=padded * OUT,
        bytes_accessed=bytes_accessed,
    )

    # Rough per-step VMEM: double-buffered x/out tiles + single intermediates.
    vmem_est = (2 * tb * IN_FEATURES + 2 * tb * OUT + tb * (H1 + H2)) * 4 + (1 << 20)
    cp_kwargs = dict(dimension_semantics=("parallel",))  # megacore sharding on v7x
    if vmem_est > 14 * 1024 * 1024:  # v5e default scoped VMEM is ~16 MiB
        cp_kwargs["vmem_limit_bytes"] = min(vmem_est + (4 << 20), 60 * 1024 * 1024)

    resident = lambda shape: pl.BlockSpec(shape, lambda i: (0, 0))  # VMEM-resident

    out_t = pl.pallas_call(
        mlp_kernel,
        out_shape=jax.ShapeDtypeStruct((OUT, padded), jnp.float32),
        grid_spec=pltpu.PrefetchScalarGridSpec(
            num_scalar_prefetch=0,
            grid=grid,
            in_specs=[
                pl.BlockSpec((tb, IN_FEATURES), lambda i: (i, 0)),  # native x tile
                resident((H1, IN_FEATURES)), resident((H1, 1)),
                resident((H2, H1)),          resident((H2, 1)),
                resident((OUT, H2)),         resident((OUT, 1)),
            ],
            out_specs=pl.BlockSpec((OUT, tb), lambda i: (0, i)),    # lane-dense out
        ),
        compiler_params=pltpu.CompilerParams(**cp_kwargs),
        cost_estimate=cost,
    )(x, w1, b1, w2, b2, w3, b3)

    return out_t[:, :batch].T  # back to [batch, OUT]


def init_params(key):
    """Deterministic init matching nn.Linear ([out, in] weights, [out, 1] biases)."""
    ks = jax.random.split(key, 6)

    def lin(kw, kb, fan_in, fan_out):
        bound = 1.0 / jnp.sqrt(fan_in)
        w = jax.random.uniform(kw, (fan_out, fan_in), jnp.float32, -bound, bound)
        b = jax.random.uniform(kb, (fan_out, 1), jnp.float32, -bound, bound)
        return w, b

    w1, b1 = lin(ks[0], ks[1], IN_FEATURES, H1)
    w2, b2 = lin(ks[2], ks[3], H1, H2)
    w3, b3 = lin(ks[4], ks[5], H2, OUT)
    return (w1, b1, w2, b2, w3, b3)


def reference_forward(x, params):
    w1, b1, w2, b2, w3, b3 = params
    h1 = jnp.maximum(x @ w1.T + b1.T, 0.0)
    h2 = jnp.maximum(h1 @ w2.T + b2.T, 0.0)
    return jax.nn.sigmoid(h2 @ w3.T + b3.T)


if __name__ == "__main__":
    key = jax.random.PRNGKey(0)
    k_x, k_p = jax.random.split(key)

    # Small batch that is not a multiple of 128: exercises the 128-row pad path
    # and a multi-step grid (padded=384 -> 3 grid steps of 128 rows).
    batch = 300
    x = jax.random.normal(k_x, (batch, IN_FEATURES), dtype=jnp.float32)
    params = init_params(k_p)

    out = mlp_forward(x, params)
    out = jax.block_until_ready(out)

    ref = reference_forward(x, params)
    assert out.shape == (batch, OUT)
    # f32 MXU accumulation + exact sigmoid; tolerance covers XLA default
    # matmul precision differences in the reference.
    assert jnp.allclose(out, ref, atol=2e-3, rtol=2e-3), "mismatch vs JAX reference"

    print("KERNEL_OK")
</pallas_src>

<mosaic_0001>
module attributes {stable_mosaic.version = 11 : i64} {
  func.func @mlp_kernel(%arg0: i32, %arg1: memref<128x24xf32, #tpu.memory_space<vmem>>, %arg2: memref<32x24xf32, #tpu.memory_space<vmem>>, %arg3: memref<32x1xf32, #tpu.memory_space<vmem>>, %arg4: memref<16x32xf32, #tpu.memory_space<vmem>>, %arg5: memref<16x1xf32, #tpu.memory_space<vmem>>, %arg6: memref<2x16xf32, #tpu.memory_space<vmem>>, %arg7: memref<2x1xf32, #tpu.memory_space<vmem>>, %arg8: memref<2x128xf32, #tpu.memory_space<vmem>>) attributes {dimension_semantics = [#tpu.dimension_semantics<parallel>], iteration_bounds = array<i64: 3>, scalar_prefetch = 0 : i64, scratch_operands = 0 : i64, tpu.core_type = #tpu.core_type<tc>, window_params = [{transform_indices = @transform_0, window_bounds = array<i64: 128, 24>}, {pipeline_mode = #tpu.pipeline_mode<synchronous>, transform_indices = @transform_1, window_bounds = array<i64: 32, 24>}, {pipeline_mode = #tpu.pipeline_mode<synchronous>, transform_indices = @transform_2, window_bounds = array<i64: 32, 1>}, {pipeline_mode = #tpu.pipeline_mode<synchronous>, transform_indices = @transform_3, window_bounds = array<i64: 16, 32>}, {pipeline_mode = #tpu.pipeline_mode<synchronous>, transform_indices = @transform_4, window_bounds = array<i64: 16, 1>}, {pipeline_mode = #tpu.pipeline_mode<synchronous>, transform_indices = @transform_5, window_bounds = array<i64: 2, 16>}, {pipeline_mode = #tpu.pipeline_mode<synchronous>, transform_indices = @transform_6, window_bounds = array<i64: 2, 1>}, {transform_indices = @transform_7, window_bounds = array<i64: 2, 128>}]} {
    %c0 = arith.constant 0 : index
    %c0_0 = arith.constant 0 : index
    %0 = vector.load %arg1[%c0, %c0_0] : memref<128x24xf32, #tpu.memory_space<vmem>>, vector<128x24xf32>
    %c0_1 = arith.constant 0 : index
    %c0_2 = arith.constant 0 : index
    %1 = vector.load %arg2[%c0_1, %c0_2] : memref<32x24xf32, #tpu.memory_space<vmem>>, vector<32x24xf32>
    %cst = arith.constant dense<0.000000e+00> : vector<32x128xf32>
    %2 = tpu.matmul %1, %0, %cst {dimension_numbers = #tpu.dot_dimension_numbers<[1], [1], [0], [0], [0, 0, 1, 0], [], []>} : vector<32x24xf32>, vector<128x24xf32>, vector<32x128xf32> -> vector<32x128xf32>
    %c0_3 = arith.constant 0 : index
    %c0_4 = arith.constant 0 : index
    %3 = vector.load %arg3[%c0_3, %c0_4] : memref<32x1xf32, #tpu.memory_space<vmem>>, vector<32x1xf32>
    %4 = vector.broadcast %3 : vector<32x1xf32> to vector<32x128xf32>
    %5 = arith.addf %2, %4 : vector<32x128xf32>
    %cst_5 = arith.constant 0.000000e+00 : f32
    %6 = vector.broadcast %cst_5 : f32 to vector<32x128xf32>
    %7 = arith.maximumf %5, %6 : vector<32x128xf32>
    %c0_6 = arith.constant 0 : index
    %c0_7 = arith.constant 0 : index
    %8 = vector.load %arg4[%c0_6, %c0_7] : memref<16x32xf32, #tpu.memory_space<vmem>>, vector<16x32xf32>
    %cst_8 = arith.constant dense<0.000000e+00> : vector<16x128xf32>
    %9 = tpu.matmul %8, %7, %cst_8 {dimension_numbers = #tpu.dot_dimension_numbers<[1], [0], [0], [1], [0, 0, 1, 1], [], []>} : vector<16x32xf32>, vector<32x128xf32>, vector<16x128xf32> -> vector<16x128xf32>
    %c0_9 = arith.constant 0 : index
    %c0_10 = arith.constant 0 : index
    %10 = vector.load %arg5[%c0_9, %c0_10] : memref<16x1xf32, #tpu.memory_space<vmem>>, vector<16x1xf32>
    %11 = vector.broadcast %10 : vector<16x1xf32> to vector<16x128xf32>
    %12 = arith.addf %9, %11 : vector<16x128xf32>
    %cst_11 = arith.constant 0.000000e+00 : f32
    %13 = vector.broadcast %cst_11 : f32 to vector<16x128xf32>
    %14 = arith.maximumf %12, %13 : vector<16x128xf32>
    %c0_12 = arith.constant 0 : index
    %c0_13 = arith.constant 0 : index
    %15 = vector.load %arg6[%c0_12, %c0_13] : memref<2x16xf32, #tpu.memory_space<vmem>>, vector<2x16xf32>
    %cst_14 = arith.constant dense<0.000000e+00> : vector<2x128xf32>
    %16 = tpu.matmul %15, %14, %cst_14 {dimension_numbers = #tpu.dot_dimension_numbers<[1], [0], [0], [1], [0, 0, 1, 1], [], []>} : vector<2x16xf32>, vector<16x128xf32>, vector<2x128xf32> -> vector<2x128xf32>
    %c0_15 = arith.constant 0 : index
    %c0_16 = arith.constant 0 : index
    %17 = vector.load %arg7[%c0_15, %c0_16] : memref<2x1xf32, #tpu.memory_space<vmem>>, vector<2x1xf32>
    %18 = vector.broadcast %17 : vector<2x1xf32> to vector<2x128xf32>
    %19 = arith.addf %16, %18 : vector<2x128xf32>
    %cst_17 = arith.constant 0.000000e+00 : f32
    %20 = vector.broadcast %cst_17 : f32 to vector<2x128xf32>
    %21 = arith.subf %20, %19 : vector<2x128xf32>
    %22 = math.exp %21 : vector<2x128xf32>
    %cst_18 = arith.constant 1.000000e+00 : f32
    %23 = vector.broadcast %cst_18 : f32 to vector<2x128xf32>
    %24 = arith.addf %23, %22 : vector<2x128xf32>
    %cst_19 = arith.constant 1.000000e+00 : f32
    %25 = vector.broadcast %cst_19 : f32 to vector<2x128xf32>
    %26 = arith.divf %25, %24 : vector<2x128xf32>
    %c0_20 = arith.constant 0 : index
    %c0_21 = arith.constant 0 : index
    %27 = vector.load %arg8[%c0_20, %c0_21] : memref<2x128xf32, #tpu.memory_space<vmem>>, vector<2x128xf32>
    tpu.vector_store %arg8[%c0_20, %c0_21], %26 {strides = array<i32>} : memref<2x128xf32, #tpu.memory_space<vmem>>, vector<2x128xf32>,
    return
  }
  func.func @transform_0(%arg0: i32) -> (i32, i32) {
    %c0_i32 = arith.constant 0 : i32
    %c0_i32_0 = arith.constant 0 : i32
    return %arg0, %c0_i32 : i32, i32
  }
  func.func @transform_1(%arg0: i32) -> (i32, i32) {
    %c0_i32 = arith.constant 0 : i32
    %c0_i32_0 = arith.constant 0 : i32
    %c0_i32_1 = arith.constant 0 : i32
    return %c0_i32, %c0_i32_0 : i32, i32
  }
  func.func @transform_2(%arg0: i32) -> (i32, i32) {
    %c0_i32 = arith.constant 0 : i32
    %c0_i32_0 = arith.constant 0 : i32
    %c0_i32_1 = arith.constant 0 : i32
    return %c0_i32, %c0_i32_0 : i32, i32
  }
  func.func @transform_3(%arg0: i32) -> (i32, i32) {
    %c0_i32 = arith.constant 0 : i32
    %c0_i32_0 = arith.constant 0 : i32
    %c0_i32_1 = arith.constant 0 : i32
    return %c0_i32, %c0_i32_0 : i32, i32
  }
  func.func @transform_4(%arg0: i32) -> (i32, i32) {
    %c0_i32 = arith.constant 0 : i32
    %c0_i32_0 = arith.constant 0 : i32
    %c0_i32_1 = arith.constant 0 : i32
    return %c0_i32, %c0_i32_0 : i32, i32
  }
  func.func @transform_5(%arg0: i32) -> (i32, i32) {
    %c0_i32 = arith.constant 0 : i32
    %c0_i32_0 = arith.constant 0 : i32
    %c0_i32_1 = arith.constant 0 : i32
    return %c0_i32, %c0_i32_0 : i32, i32
  }
  func.func @transform_6(%arg0: i32) -> (i32, i32) {
    %c0_i32 = arith.constant 0 : i32
    %c0_i32_0 = arith.constant 0 : i32
    %c0_i32_1 = arith.constant 0 : i32
    return %c0_i32, %c0_i32_0 : i32, i32
  }
  func.func @transform_7(%arg0: i32) -> (i32, i32) {
    %c0_i32 = arith.constant 0 : i32
    %c0_i32_0 = arith.constant 0 : i32
    return %c0_i32, %arg0 : i32, i32
  }
}

</mosaic_0001>

<llo_original>
// kernel: tpu_custom_call.1
$region0: #{tpu_custom_call.1}
  #allocation0 [shape = 'u32[]', space=smem, size = 0x4, offset = 0x4, fixed_abs, tag = 'smem constant byte address 0x4 - core index']
  #allocation1 [shape = 'u32[144,128]{1,0:T(1,128)}', space=vmem, size = 0x12000, scoped, tag = 'internal scratch']
  %s0 = inlined_call_operand.vmem [shape: f32[384,24], index: 0, kind: input, shape index: {}]
  %s1 = inlined_call_operand.vmem [shape: f32[32,24], index: 1, kind: input, shape index: {}]
  %s2 = inlined_call_operand.vmem [shape: f32[32,1], index: 2, kind: input, shape index: {}]
  %s3 = inlined_call_operand.vmem [shape: f32[16,32], index: 3, kind: input, shape index: {}]
  %s4 = inlined_call_operand.vmem [shape: f32[16,1], index: 4, kind: input, shape index: {}]
  %s5 = inlined_call_operand.vmem [shape: f32[2,16], index: 5, kind: input, shape index: {}]
  %s6 = inlined_call_operand.vmem [shape: f32[2,1], index: 6, kind: input, shape index: {}]
  %s7 = inlined_call_operand.hbm [shape: f32[2,384], index: 7, kind: output, shape index: {}]
  %s8 = sld [smem:[#allocation0]]
  $region61: #{tpu_custom_call.1} parent=0
    _
  %s10 = ssub.s32 1, %s8
  %s11 = scalar_select 0, %s10, %s8
  $region1: #{tpu_custom_call.1} parent=0
    #allocation2 [shape = 'u8[2048]{0}', space=vmem, size = 0x800, scoped, tag = 'output window, operand 0']
    #allocation3 [shape = 's32[2]{0}', space=sflag, size = 0x8, scoped, tag = 'scoped memory for tpu_custom_call.1']
    %12 = vsyncpa [#allocation3], 0
    %s13 = scalar_lea.sflag [#allocation3], 1
    %14 = vsyncpa %s13, 0
    loop: start=0, step=1, limit=5
    $region2: #{tpu_custom_call.1} parent=1 // loop_pre_header
      _
    $region3: #{tpu_custom_call.1} parent=1 // loop_header
      %s16 = sphi 0, %s20
      %p17 = scmp.ge.s32.totalorder %s16, 5
      %s26 = sphi 0, %s28
      %s29 = sphi 0, %s26
      %s30 = sphi 0, %s29
      %s46 = sphi 0, %s30
      %s50 = sphi 0, %s50
      %s52 = sphi 0, %s50
      %s53 = sphi 0, %s52
      %s67 = sphi 0, %s53
      %s71 = sphi 0, %s71
      %s73 = sphi 0, %s71
      %s74 = sphi 0, %s73
      %s88 = sphi 0, %s74
      %s92 = sphi 0, %s92
      %s94 = sphi 0, %s92
      %s95 = sphi 0, %s94
      %s109 = sphi 0, %s95
      %s113 = sphi 0, %s113
      %s115 = sphi 0, %s113
      %s116 = sphi 0, %s115
      %s130 = sphi 0, %s116
      %s134 = sphi 0, %s134
      %s136 = sphi 0, %s134
      %s137 = sphi 0, %s136
      %s151 = sphi 0, %s137
      %s155 = sphi 0, %s155
      %s157 = sphi 0, %s155
      %s158 = sphi 0, %s157
      %s172 = sphi 0, %s158
      %s178 = sphi 0, %s180
      %s181 = sphi 0, %s178
      %s182 = sphi 0, %s181
      %s198 = sphi 0, %s182
    $region4: #{tpu_custom_call.1} parent=1 // loop_header_branch
      %19 = sbr.rel (%p17) target = $region8
    $region5: #{tpu_custom_call.1} parent=1 // loop_body
      %s21 = ssub.s32 %s16, 1
      %s22 = ssub.s32 %s16, 2
      %s23 = sadd.s32 %s16, 1
      %s24 = ssub.s32 %s16, %s23
      %p25 = scmp.eq.s32.totalorder %s24, 0
      %s27 = sadd.s32 %s26, 1
      %s28 = scalar_select %p25, %s26, %s27
      %p31 = pneg %p25
      %p32 = scmp.eq.s32.totalorder %s16, 2
      %p33 = por %p31, %p32
      %p34 = scmp.ne.s32.totalorder %s26, %s29
      %p35 = scmp.eq.s32.totalorder %s16, 0
      %p36 = por %p34, %p35
      %p37 = scmp.ne.s32.totalorder %s26, %s29
      %p38 = scmp.eq.s32.totalorder %s21, 2
      %p39 = por %p37, %p38
      %p40 = scmp.ne.s32.totalorder %s29, %s30
      %p41 = scmp.eq.s32.totalorder %s21, 0
      %p42 = por %p40, %p41
      %p43 = scmp.ne.s32.totalorder %s29, %s30
      %p44 = scmp.eq.s32.totalorder %s22, 2
      %p45 = por %p43, %p44
      %p47 = scmp.ne.s32.totalorder %s30, %s46
      %p48 = scmp.eq.s32.totalorder %s22, 0
      %p49 = por %p47, %p48
      %s51 = sadd.s32 %s50, 1
      %p54 = scmp.eq.s32.totalorder %s16, 2
      %p55 = scmp.ne.s32.totalorder %s50, %s52
      %p56 = scmp.eq.s32.totalorder %s16, 0
      %p57 = por %p55, %p56
      %p58 = scmp.ne.s32.totalorder %s50, %s52
      %p59 = scmp.eq.s32.totalorder %s21, 2
      %p60 = por %p58, %p59
      %p61 = scmp.ne.s32.totalorder %s52, %s53
      %p62 = scmp.eq.s32.totalorder %s21, 0
      %p63 = por %p61, %p62
      %p64 = scmp.ne.s32.totalorder %s52, %s53
      %p65 = scmp.eq.s32.totalorder %s22, 2
      %p66 = por %p64, %p65
      %p68 = scmp.ne.s32.totalorder %s53, %s67
      %p69 = scmp.eq.s32.totalorder %s22, 0
      %p70 = por %p68, %p69
      %s72 = sadd.s32 %s71, 1
      %p75 = scmp.eq.s32.totalorder %s16, 2
      %p76 = scmp.ne.s32.totalorder %s71, %s73
      %p77 = scmp.eq.s32.totalorder %s16, 0
      %p78 = por %p76, %p77
      %p79 = scmp.ne.s32.totalorder %s71, %s73
      %p80 = scmp.eq.s32.totalorder %s21, 2
      %p81 = por %p79, %p80
      %p82 = scmp.ne.s32.totalorder %s73, %s74
      %p83 = scmp.eq.s32.totalorder %s21, 0
      %p84 = por %p82, %p83
      %p85 = scmp.ne.s32.totalorder %s73, %s74
      %p86 = scmp.eq.s32.totalorder %s22, 2
      %p87 = por %p85, %p86
      %p89 = scmp.ne.s32.totalorder %s74, %s88
      %p90 = scmp.eq.s32.totalorder %s22, 0
      %p91 = por %p89, %p90
      %s93 = sadd.s32 %s92, 1
      %p96 = scmp.eq.s32.totalorder %s16, 2
      %p97 = scmp.ne.s32.totalorder %s92, %s94
      %p98 = scmp.eq.s32.totalorder %s16, 0
      %p99 = por %p97, %p98
      %p100 = scmp.ne.s32.totalorder %s92, %s94
      %p101 = scmp.eq.s32.totalorder %s21, 2
      %p102 = por %p100, %p101
      %p103 = scmp.ne.s32.totalorder %s94, %s95
      %p104 = scmp.eq.s32.totalorder %s21, 0
      %p105 = por %p103, %p104
      %p106 = scmp.ne.s32.totalorder %s94, %s95
      %p107 = scmp.eq.s32.totalorder %s22, 2
      %p108 = por %p106, %p107
      %p110 = scmp.ne.s32.totalorder %s95, %s109
      %p111 = scmp.eq.s32.totalorder %s22, 0
      %p112 = por %p110, %p111
      %s114 = sadd.s32 %s113, 1
      %p117 = scmp.eq.s32.totalorder %s16, 2
      %p118 = scmp.ne.s32.totalorder %s113, %s115
      %p119 = scmp.eq.s32.totalorder %s16, 0
      %p120 = por %p118, %p119
      %p121 = scmp.ne.s32.totalorder %s113, %s115
      %p122 = scmp.eq.s32.totalorder %s21, 2
      %p123 = por %p121, %p122
      %p124 = scmp.ne.s32.totalorder %s115, %s116
      %p125 = scmp.eq.s32.totalorder %s21, 0
      %p126 = por %p124, %p125
      %p127 = scmp.ne.s32.totalorder %s115, %s116
      %p128 = scmp.eq.s32.totalorder %s22, 2
      %p129 = por %p127, %p128
      %p131 = scmp.ne.s32.totalorder %s116, %s130
      %p132 = scmp.eq.s32.totalorder %s22, 0
      %p133 = por %p131, %p132
      %s135 = sadd.s32 %s134, 1
      %p138 = scmp.eq.s32.totalorder %s16, 2
      %p139 = scmp.ne.s32.totalorder %s134, %s136
      %p140 = scmp.eq.s32.totalorder %s16, 0
      %p141 = por %p139, %p140
      %p142 = scmp.ne.s32.totalorder %s134, %s136
      %p143 = scmp.eq.s32.totalorder %s21, 2
      %p144 = por %p142, %p143
      %p145 = scmp.ne.s32.totalorder %s136, %s137
      %p146 = scmp.eq.s32.totalorder %s21, 0
      %p147 = por %p145, %p146
      %p148 = scmp.ne.s32.totalorder %s136, %s137
      %p149 = scmp.eq.s32.totalorder %s22, 2
      %p150 = por %p148, %p149
      %p152 = scmp.ne.s32.totalorder %s137, %s151
      %p153 = scmp.eq.s32.totalorder %s22, 0
      %p154 = por %p152, %p153
      %s156 = sadd.s32 %s155, 1
      %p159 = scmp.eq.s32.totalorder %s16, 2
      %p160 = scmp.ne.s32.totalorder %s155, %s157
      %p161 = scmp.eq.s32.totalorder %s16, 0
      %p162 = por %p160, %p161
      %p163 = scmp.ne.s32.totalorder %s155, %s157
      %p164 = scmp.eq.s32.totalorder %s21, 2
      %p165 = por %p163, %p164
      %p166 = scmp.ne.s32.totalorder %s157, %s158
      %p167 = scmp.eq.s32.totalorder %s21, 0
      %p168 = por %p166, %p167
      %p169 = scmp.ne.s32.totalorder %s157, %s158
      %p170 = scmp.eq.s32.totalorder %s22, 2
      %p171 = por %p169, %p170
      %p173 = scmp.ne.s32.totalorder %s158, %s172
      %p174 = scmp.eq.s32.totalorder %s22, 0
      %p175 = por %p173, %p174
      %s176 = ssub.s32 %s16, %s23
      %p177 = scmp.eq.s32.totalorder %s176, 0
      %s179 = sadd.s32 %s178, 1
      %s180 = scalar_select %p177, %s178, %s179
      %p183 = pneg %p177
      %p184 = scmp.eq.s32.totalorder %s16, 2
      %p185 = por %p183, %p184
      %p186 = scmp.ne.s32.totalorder %s178, %s181
      %p187 = scmp.eq.s32.totalorder %s16, 0
      %p188 = por %p186, %p187
      %p189 = scmp.ne.s32.totalorder %s178, %s181
      %p190 = scmp.eq.s32.totalorder %s21, 2
      %p191 = por %p189, %p190
      %p192 = scmp.ne.s32.totalorder %s181, %s182
      %p193 = scmp.eq.s32.totalorder %s21, 0
      %p194 = por %p192, %p193
      %p195 = scmp.ne.s32.totalorder %s181, %s182
      %p196 = scmp.eq.s32.totalorder %s22, 2
      %p197 = por %p195, %p196
      %p199 = scmp.ne.s32.totalorder %s182, %s198
      %p200 = scmp.eq.s32.totalorder %s22, 0
      %p201 = por %p199, %p200
      %p202 = scmp.le.s32.totalorder 1, %s16
      %p203 = scmp.lt.s32.totalorder %s16, 4
      %p204 = pnand %p202, %p203
      %p205 = pneg %p204
      // Predicated region
      $region9: #{tpu_custom_call.1} parent=5 // pred_check
        _
      $region10: #{tpu_custom_call.1} parent=5 // pred_check_branch
        %207 = sbr.rel (%p204) target = $region12
      $region11: #{tpu_custom_call.1} parent=5 // pred_region
        %s208 = ssub.s32 %s16, 1
        // Predicated region
        $region13: #{tpu_custom_call.1} parent=11 // pred_check
          %p209 = pneg %p63
        $region14: #{tpu_custom_call.1} parent=11 // pred_check_branch
          %211 = sbr.rel (%p209) target = $region16
        $region15: #{tpu_custom_call.1} parent=11 // pred_region
          _
        $region16: #{tpu_custom_call.1} parent=11 // pred_fallthru
          _
        // Predicated region
        $region17: #{tpu_custom_call.1} parent=11 // pred_check
          %p212 = pneg %p84
        $region18: #{tpu_custom_call.1} parent=11 // pred_check_branch
          %214 = sbr.rel (%p212) target = $region20
        $region19: #{tpu_custom_call.1} parent=11 // pred_region
          _
        $region20: #{tpu_custom_call.1} parent=11 // pred_fallthru
          _
        // Predicated region
        $region21: #{tpu_custom_call.1} parent=11 // pred_check
          %p215 = pneg %p105
        $region22: #{tpu_custom_call.1} parent=11 // pred_check_branch
          %217 = sbr.rel (%p215) target = $region24
        $region23: #{tpu_custom_call.1} parent=11 // pred_region
          _
        $region24: #{tpu_custom_call.1} parent=11 // pred_fallthru
          _
        // Predicated region
        $region25: #{tpu_custom_call.1} parent=11 // pred_check
          %p218 = pneg %p126
        $region26: #{tpu_custom_call.1} parent=11 // pred_check_branch
          %220 = sbr.rel (%p218) target = $region28
        $region27: #{tpu_custom_call.1} parent=11 // pred_region
          _
        $region28: #{tpu_custom_call.1} parent=11 // pred_fallthru
          _
        // Predicated region
        $region29: #{tpu_custom_call.1} parent=11 // pred_check
          %p221 = pneg %p147
        $region30: #{tpu_custom_call.1} parent=11 // pred_check_branch
          %223 = sbr.rel (%p221) target = $region32
        $region31: #{tpu_custom_call.1} parent=11 // pred_region
          _
        $region32: #{tpu_custom_call.1} parent=11 // pred_fallthru
          _
        // Predicated region
        $region33: #{tpu_custom_call.1} parent=11 // pred_check
          %p224 = pneg %p168
        $region34: #{tpu_custom_call.1} parent=11 // pred_check_branch
          %226 = sbr.rel (%p224) target = $region36
        $region35: #{tpu_custom_call.1} parent=11 // pred_region
          _
        $region36: #{tpu_custom_call.1} parent=11 // pred_fallthru
          _
      $region12: #{tpu_custom_call.1} parent=5 // pred_fallthru
        _
      %p227 = scmp.lt.s32.totalorder %s16, 3
      // Predicated region
      $region37: #{tpu_custom_call.1} parent=5 // pred_check
        %p228 = pneg %p227
      $region38: #{tpu_custom_call.1} parent=5 // pred_check_branch
        %230 = sbr.rel (%p228) target = $region40
      $region39: #{tpu_custom_call.1} parent=5 // pred_region
        // Predicated region
        $region41: #{tpu_custom_call.1} parent=39 // pred_check
          %p231 = pneg %p36
        $region42: #{tpu_custom_call.1} parent=39 // pred_check_branch
          %233 = sbr.rel (%p231) target = $region44
        $region43: #{tpu_custom_call.1} parent=39 // pred_region
          %s234 = smul.u32 16, %s16
          %p235 = scmp.lt.s32.totalorder %s234, 47
          %s236 = scalar_select %p235, %s234, 47
          %s237 = smul.addr %s236, 8
          %s238 = scalar_lea.vmem %s0, %s237
          %s239 = smul.u32 16, %s16
        $region44: #{tpu_custom_call.1} parent=39 // pred_fallthru
          _
      $region40: #{tpu_custom_call.1} parent=5 // pred_fallthru
        _
      %p240 = scmp.le.s32.totalorder 1, %s16
      %p241 = scmp.lt.s32.totalorder %s16, 4
      %p242 = pnand %p240, %p241
      %p243 = pneg %p242
      // Predicated region
      $region45: #{tpu_custom_call.1} parent=5 // pred_check
        _
      $region46: #{tpu_custom_call.1} parent=5 // pred_check_branch
        %245 = sbr.rel (%p242) target = $region48
      $region47: #{tpu_custom_call.1} parent=5 // pred_region
        %s246 = ssub.s32 %s16, 1
        %s247 = smul.u32 16, %s21
        %p248 = scmp.lt.s32.totalorder %s247, 47
        %s249 = scalar_select %p248, %s247, 47
        %s250 = smul.addr %s249, 8
        %s251 = scalar_lea.vmem %s0, %s250
        %p252 = pneg %p42
        %p253 = pneg %p39
        %p254 = pneg %p63
        %p255 = pneg %p60
        %p256 = pneg %p84
        %p257 = pneg %p81
        %p258 = pneg %p105
        %p259 = pneg %p102
        %p260 = pneg %p126
        %p261 = pneg %p123
        %p262 = pneg %p147
        %p263 = pneg %p144
        %p264 = pneg %p168
        %p265 = pneg %p165
        %p266 = pneg %p194
        %p267 = pneg %p191
        %s268 = sand.u32 %s181, 1
        %s269 = scalar_lea.sflag [#allocation3], %s268
        %s270 = sand.u32 %s181, 1
        %s271 = smul.addr %s270, 2
        %s272 = scalar_lea.vmem [#allocation2], %s271
        %s273 = smul.u32 16, %s21
        %p274 = scmp.lt.s32.totalorder %s273, 47
        %s275 = scalar_select %p274, %s273, 47
        %s276 = smul.addr %s275, 8
        %s277 = scalar_lea.vmem %s0, %s276
        %s278 = smul.u32 16, %s21
        %v279 = vld [vmem:[%s277] sm:$0xff]
        %v280 = vld [vmem:[%s277 + $0x8] sm:$0xff]
        %v281 = vld [vmem:[%s277 + $0x10] sm:$0xff]
        %v282 = vld [vmem:[%s277 + $0x18] sm:$0xff]
        %v283 = vld [vmem:[%s277 + $0x20] sm:$0xff]
        %v284 = vld [vmem:[%s277 + $0x28] sm:$0xff]
        %v285 = vld [vmem:[%s277 + $0x30] sm:$0xff]
        %v286 = vld [vmem:[%s277 + $0x38] sm:$0xff]
        %v287 = vld [vmem:[%s277 + $0x40] sm:$0xff]
        %v288 = vld [vmem:[%s277 + $0x48] sm:$0xff]
        %v289 = vld [vmem:[%s277 + $0x50] sm:$0xff]
        %v290 = vld [vmem:[%s277 + $0x58] sm:$0xff]
        %v291 = vld [vmem:[%s277 + $0x60] sm:$0xff]
        %v292 = vld [vmem:[%s277 + $0x68] sm:$0xff]
        %v293 = vld [vmem:[%s277 + $0x70] sm:$0xff]
        %v294 = vld [vmem:[%s277 + $0x78] sm:$0xff]
        %v295 = vld [vmem:[%s1] sm:$0xff]
        %v296 = vld [vmem:[%s1 + $0x8] sm:$0xff]
        %v297 = vld [vmem:[%s1 + $0x10] sm:$0xff]
        %v298 = vld [vmem:[%s1 + $0x18] sm:$0xff]
        %v299 = vld [vmem:[%s2] sm:$0xff]
        %v300 = vld [vmem:[%s2 + $0x8] sm:$0xff]
        %v301 = vld [vmem:[%s2 + $0x10] sm:$0xff]
        %v302 = vld [vmem:[%s2 + $0x18] sm:$0xff]
        %304 = vset.pattern.permute.xlu0 0
        %305 = vperm.xlu0 %304, %v299
        %v306 = vpop.permute.xlu0 %305
        %309 = vset.pattern.permute.xlu0 0
        %310 = vperm.xlu0 %309, %v300
        %v311 = vpop.permute.xlu0 %310
        %314 = vset.pattern.permute.xlu0 0
        %315 = vperm.xlu0 %314, %v301
        %v316 = vpop.permute.xlu0 %315
        %319 = vset.pattern.permute.xlu0 0
        %320 = vperm.xlu0 %319, %v302
        %v321 = vpop.permute.xlu0 %320
        %vm323 = vcmask 195584
        %v325 = vsel %vm323, %v295, 0
        %v328 = vsel %vm323, %v296, 0
        %v331 = vsel %vm323, %v297, 0
        %v334 = vsel %vm323, %v298, 0
        %v337 = vsel %vm323, %v279, 0
        %v340 = vsel %vm323, %v280, 0
        %v343 = vsel %vm323, %v281, 0
        %v346 = vsel %vm323, %v282, 0
        %v349 = vsel %vm323, %v283, 0
        %v352 = vsel %vm323, %v284, 0
        %v355 = vsel %vm323, %v285, 0
        %v358 = vsel %vm323, %v286, 0
        %v361 = vsel %vm323, %v287, 0
        %v364 = vsel %vm323, %v288, 0
        %v367 = vsel %vm323, %v289, 0
        %v370 = vsel %vm323, %v290, 0
        %v373 = vsel %vm323, %v291, 0
        %v376 = vsel %vm323, %v292, 0
        %v379 = vsel %vm323, %v293, 0
        %v382 = vsel %vm323, %v294, 0
        %384 = vmatprep.subr.mxu0 0.0
        %385 = vmatpush1.xpose.msra.mxu0 %v337
        %386 = vmatprep.subr.mxu0 0.0
        %387 = vmatpush1.xpose.msra.mxu0 %v340
        %388 = vmatprep.subr.mxu0 0.0
        %389 = vmatpush1.xpose.msra.mxu0 %v343
        %390 = vmatprep.subr.mxu0 0.0
        %391 = vmatpush1.xpose.msra.mxu0 %v346
        %392 = vmatprep.subr.mxu0 0.0
        %393 = vmatpush1.xpose.msra.mxu0 %v349
        %394 = vmatprep.subr.mxu0 0.0
        %395 = vmatpush1.xpose.msra.mxu0 %v352
        %396 = vmatprep.subr.mxu0 0.0
        %397 = vmatpush1.xpose.msra.mxu0 %v355
        %398 = vmatprep.subr.mxu0 0.0
        %399 = vmatpush1.xpose.msra.mxu0 %v358
        %400 = vmatprep.subr.mxu0 0.0
        %401 = vmatpush1.xpose.msra.mxu0 %v361
        %402 = vmatprep.subr.mxu0 0.0
        %403 = vmatpush1.xpose.msra.mxu0 %v364
        %404 = vmatprep.subr.mxu0 0.0
        %405 = vmatpush1.xpose.msra.mxu0 %v367
        %406 = vmatprep.subr.mxu0 0.0
        %407 = vmatpush1.xpose.msra.mxu0 %v370
        %408 = vmatprep.subr.mxu0 0.0
        %409 = vmatpush1.xpose.msra.mxu0 %v373
        %410 = vmatprep.subr.mxu0 0.0
        %411 = vmatpush1.xpose.msra.mxu0 %v376
        %412 = vmatprep.subr.mxu0 0.0
        %413 = vmatpush1.xpose.msra.mxu0 %v379
        %414 = vmatprep.subr.mxu0 0.0
        %415 = vmatpush1.xpose.msra.mxu0 %v382
        %416 = vmatprep.subr.mxu0 0.0
        %417 = vmatpush1.xpose.msra.mxu0 0.0
        %418 = vmatprep.subr.mxu0 0.0
        %419 = vmatpush1.xpose.msra.mxu0 0.0
        %420 = vmatprep.subr.mxu0 0.0
        %421 = vmatpush1.xpose.msra.mxu0 0.0
        %422 = vmatprep.subr.mxu0 0.0
        %423 = vmatpush1.xpose.msra.mxu0 0.0
        %424 = vmatprep.subr.mxu0 0.0
        %425 = vmatpush1.xpose.msra.mxu0 0.0
        %426 = vmatprep.subr.mxu0 0.0
        %427 = vmatpush1.xpose.msra.mxu0 0.0
        %428 = vmatprep.subr.mxu0 0.0
        %429 = vmatpush1.xpose.msra.mxu0 0.0
        %430 = vmatprep.subr.mxu0 0.0
        %431 = vmatpush1.xpose.msra.mxu0 0.0
        %432 = vmatprep.subr.mxu0 0.0
        %433 = vmatpush1.xpose.msra.mxu0 0.0
        %434 = vmatprep.subr.mxu0 0.0
        %435 = vmatpush1.xpose.msra.mxu0 0.0
        %436 = vmatprep.subr.mxu0 0.0
        %437 = vmatpush1.xpose.msra.mxu0 0.0
        %438 = vmatprep.subr.mxu0 0.0
        %439 = vmatpush1.xpose.msra.mxu0 0.0
        %440 = vmatprep.subr.mxu0 0.0
        %441 = vmatpush1.xpose.msra.mxu0 0.0
        %442 = vmatprep.subr.mxu0 0.0
        %443 = vmatpush1.xpose.msra.mxu0 0.0
        %444 = vmatprep.subr.mxu0 0.0
        %445 = vmatpush1.xpose.msra.mxu0 0.0
        %446 = vmatprep.subr.mxu0 0.0
        %447 = vmatpush1.xpose.msra.mxu0 0.0
        %448 = vmatprep.mubr.f32.mxu0 0.0
        %449 = vmatmul.mubr.f32.gmra.mrb[0].mxu0 %v325
        %v450 = vpop.f32.mrb[0].mxu0
        %v451 = vadd.f32 %v306, %v450
        %v452 = vpop.f32.mrb[0].mxu0
        %453 = vmatprep.mubr.f32.mxu0 0.0
        %454 = vmatmul.mubr.f32.gmra.mrb[0].mxu0 %v328
        %v455 = vpop.f32.mrb[0].mxu0
        %v456 = vadd.f32 %v311, %v455
        %v457 = vpop.f32.mrb[0].mxu0
        %458 = vmatprep.mubr.f32.mxu0 0.0
        %459 = vmatmul.mubr.f32.gmra.mrb[0].mxu0 %v331
        %v460 = vpop.f32.mrb[0].mxu0
        %v461 = vadd.f32 %v316, %v460
        %v462 = vpop.f32.mrb[0].mxu0
        %463 = vmatprep.mubr.f32.mxu0 0.0
        %464 = vmatmul.mubr.f32.gmra.mrb[0].mxu0 %v334
        %v465 = vpop.f32.mrb[0].mxu0
        %v466 = vadd.f32 %v321, %v465
        %v467 = vpop.f32.mrb[0].mxu0
        %468 = vdwg.mxu0
        %v469 = vmax.f32 %v451, 0.0
        %v470 = vmax.f32 %v456, 0.0
        %v471 = vmax.f32 %v461, 0.0
        %v472 = vmax.f32 %v466, 0.0
        %v473 = vld [vmem:[%s3] sm:$0xff]
        %v474 = vld [vmem:[%s3 + $0x8] sm:$0xff]
        %v475 = vld [vmem:[%s4] sm:$0xff]
        %v476 = vld [vmem:[%s4 + $0x8] sm:$0xff]
        %478 = vset.pattern.permute.xlu0 0
        %479 = vperm.xlu0 %478, %v475
        %v480 = vpop.permute.xlu0 %479
        %483 = vset.pattern.permute.xlu0 0
        %484 = vperm.xlu0 %483, %v476
        %v485 = vpop.permute.xlu0 %484
        %vm487 = vcmask 261120
        %v489 = vsel %vm487, %v473, 0
        %v492 = vsel %vm487, %v474, 0
        %494 = vmatprep.subr.mxu0 0.0
        %495 = vmatpush1.msra.mxu0 %v469
        %496 = vmatprep.subr.mxu0 0.0
        %497 = vmatpush1.msra.mxu0 %v470
        %498 = vmatprep.subr.mxu0 0.0
        %499 = vmatpush1.msra.mxu0 %v471
        %500 = vmatprep.subr.mxu0 0.0
        %501 = vmatpush1.msra.mxu0 %v472
        %502 = vmatprep.subr.mxu0 0.0
        %503 = vmatpush1.msra.mxu0 0.0
        %504 = vmatprep.subr.mxu0 0.0
        %505 = vmatpush1.msra.mxu0 0.0
        %506 = vmatprep.subr.mxu0 0.0
        %507 = vmatpush1.msra.mxu0 0.0
        %508 = vmatprep.subr.mxu0 0.0
        %509 = vmatpush1.msra.mxu0 0.0
        %510 = vmatprep.subr.mxu0 0.0
        %511 = vmatpush1.msra.mxu0 0.0
        %512 = vmatprep.subr.mxu0 0.0
        %513 = vmatpush1.msra.mxu0 0.0
        %514 = vmatprep.subr.mxu0 0.0
        %515 = vmatpush1.msra.mxu0 0.0
        %516 = vmatprep.subr.mxu0 0.0
        %517 = vmatpush1.msra.mxu0 0.0
        %518 = vmatprep.subr.mxu0 0.0
        %519 = vmatpush1.msra.mxu0 0.0
        %520 = vmatprep.subr.mxu0 0.0
        %521 = vmatpush1.msra.mxu0 0.0
        %522 = vmatprep.subr.mxu0 0.0
        %523 = vmatpush1.msra.mxu0 0.0
        %524 = vmatprep.subr.mxu0 0.0
        %525 = vmatpush1.msra.mxu0 0.0
        %526 = vmatprep.subr.mxu0 0.0
        %527 = vmatpush1.msra.mxu0 0.0
        %528 = vmatprep.subr.mxu0 0.0
        %529 = vmatpush1.msra.mxu0 0.0
        %530 = vmatprep.subr.mxu0 0.0
        %531 = vmatpush1.msra.mxu0 0.0
        %532 = vmatprep.subr.mxu0 0.0
        %533 = vmatpush1.msra.mxu0 0.0
        %534 = vmatprep.subr.mxu0 0.0
        %535 = vmatpush1.msra.mxu0 0.0
        %536 = vmatprep.subr.mxu0 0.0
        %537 = vmatpush1.msra.mxu0 0.0
        %538 = vmatprep.subr.mxu0 0.0
        %539 = vmatpush1.msra.mxu0 0.0
        %540 = vmatprep.subr.mxu0 0.0
        %541 = vmatpush1.msra.mxu0 0.0
        %542 = vmatprep.subr.mxu0 0.0
        %543 = vmatpush1.msra.mxu0 0.0
        %544 = vmatprep.subr.mxu0 0.0
        %545 = vmatpush1.msra.mxu0 0.0
        %546 = vmatprep.subr.mxu0 0.0
        %547 = vmatpush1.msra.mxu0 0.0
        %548 = vmatprep.subr.mxu0 0.0
        %549 = vmatpush1.msra.mxu0 0.0
        %550 = vmatprep.subr.mxu0 0.0
        %551 = vmatpush1.msra.mxu0 0.0
        %552 = vmatprep.subr.mxu0 0.0
        %553 = vmatpush1.msra.mxu0 0.0
        %554 = vmatprep.subr.mxu0 0.0
        %555 = vmatpush1.msra.mxu0 0.0
        %556 = vmatprep.subr.mxu0 0.0
        %557 = vmatpush1.msra.mxu0 0.0
        %558 = vmatprep.mubr.f32.mxu0 0.0
        %559 = vmatmul.mubr.f32.gmra.mrb[0].mxu0 %v489
        %v560 = vpop.f32.mrb[0].mxu0
        %v561 = vadd.f32 %v480, %v560
        %v562 = vpop.f32.mrb[0].mxu0
        %563 = vmatprep.mubr.f32.mxu0 0.0
        %564 = vmatmul.mubr.f32.gmra.mrb[0].mxu0 %v492
        %v565 = vpop.f32.mrb[0].mxu0
        %v566 = vadd.f32 %v485, %v565
        %v567 = vpop.f32.mrb[0].mxu0
        %568 = vdwg.mxu0
        %v569 = vmax.f32 %v561, 0.0
        %v570 = vmax.f32 %v566, 0.0
        %v571 = vld [vmem:[%s5] sm:$0x3]
        %v572 = vld [vmem:[%s6] sm:$0x3]
        %574 = vset.pattern.permute.xlu0 0
        %575 = vperm.xlu0 %574, %v572
        %v576 = vpop.permute.xlu0 %575
        %vm578 = vcmask 130048
        %v580 = vsel %vm578, %v571, 0
        %582 = vmatprep.subr.mxu0 0.0
        %583 = vmatpush1.msra.mxu0 %v569
        %584 = vmatprep.subr.mxu0 0.0
        %585 = vmatpush1.msra.mxu0 %v570
        %586 = vmatprep.subr.mxu0 0.0
        %587 = vmatpush1.msra.mxu0 0.0
        %588 = vmatprep.subr.mxu0 0.0
        %589 = vmatpush1.msra.mxu0 0.0
        %590 = vmatprep.subr.mxu0 0.0
        %591 = vmatpush1.msra.mxu0 0.0
        %592 = vmatprep.subr.mxu0 0.0
        %593 = vmatpush1.msra.mxu0 0.0
        %594 = vmatprep.subr.mxu0 0.0
        %595 = vmatpush1.msra.mxu0 0.0
        %596 = vmatprep.subr.mxu0 0.0
        %597 = vmatpush1.msra.mxu0 0.0
        %598 = vmatprep.subr.mxu0 0.0
        %599 = vmatpush1.msra.mxu0 0.0
        %600 = vmatprep.subr.mxu0 0.0
        %601 = vmatpush1.msra.mxu0 0.0
        %602 = vmatprep.subr.mxu0 0.0
        %603 = vmatpush1.msra.mxu0 0.0
        %604 = vmatprep.subr.mxu0 0.0
        %605 = vmatpush1.msra.mxu0 0.0
        %606 = vmatprep.subr.mxu0 0.0
        %607 = vmatpush1.msra.mxu0 0.0
        %608 = vmatprep.subr.mxu0 0.0
        %609 = vmatpush1.msra.mxu0 0.0
        %610 = vmatprep.subr.mxu0 0.0
        %611 = vmatpush1.msra.mxu0 0.0
        %612 = vmatprep.subr.mxu0 0.0
        %613 = vmatpush1.msra.mxu0 0.0
        %614 = vmatprep.subr.mxu0 0.0
        %615 = vmatpush1.msra.mxu0 0.0
        %616 = vmatprep.subr.mxu0 0.0
        %617 = vmatpush1.msra.mxu0 0.0
        %618 = vmatprep.subr.mxu0 0.0
        %619 = vmatpush1.msra.mxu0 0.0
        %620 = vmatprep.subr.mxu0 0.0
        %621 = vmatpush1.msra.mxu0 0.0
        %622 = vmatprep.subr.mxu0 0.0
        %623 = vmatpush1.msra.mxu0 0.0
        %624 = vmatprep.subr.mxu0 0.0
        %625 = vmatpush1.msra.mxu0 0.0
        %626 = vmatprep.subr.mxu0 0.0
        %627 = vmatpush1.msra.mxu0 0.0
        %628 = vmatprep.subr.mxu0 0.0
        %629 = vmatpush1.msra.mxu0 0.0
        %630 = vmatprep.subr.mxu0 0.0
        %631 = vmatpush1.msra.mxu0 0.0
        %632 = vmatprep.subr.mxu0 0.0
        %633 = vmatpush1.msra.mxu0 0.0
        %634 = vmatprep.subr.mxu0 0.0
        %635 = vmatpush1.msra.mxu0 0.0
        %636 = vmatprep.subr.mxu0 0.0
        %637 = vmatpush1.msra.mxu0 0.0
        %638 = vmatprep.subr.mxu0 0.0
        %639 = vmatpush1.msra.mxu0 0.0
        %640 = vmatprep.subr.mxu0 0.0
        %641 = vmatpush1.msra.mxu0 0.0
        %642 = vmatprep.subr.mxu0 0.0
        %643 = vmatpush1.msra.mxu0 0.0
        %644 = vmatprep.subr.mxu0 0.0
        %645 = vmatpush1.msra.mxu0 0.0
        %646 = vmatprep.mubr.f32.mxu0 0.0
        %647 = vmatmul.mubr.f32.gmra.mrb[0].mxu0 %v580
        %v648 = vpop.f32.mrb[0].mxu0
        %v649 = vadd.f32 %v576, %v648
        %v650 = vpop.f32.mrb[0].mxu0
        %651 = vdwg.mxu0
        %v652 = vsub.f32 0.0, %v649
        %v653 = vmul.f32 %v652, 1.442695
        %v654 = vpow.pop %v653
        %v655 = vadd.f32 %v654, 1.0
        %v656 = vrcp.pop %v655
        %v657 = vmul.f32 1.0, %v656
        %658 = vst [vmem:[%s272] sm:$0x3] %v657
        %s659 = sand.u32 %s181, 1
        %s660 = scalar_lea.sflag [#allocation3], %s659
        %s661 = sand.u32 %s181, 1
        %s662 = smul.addr %s661, 2
        %s663 = scalar_lea.vmem [#allocation2], %s662
        // Predicated region
        $region49: #{tpu_custom_call.1} parent=47 // pred_check
          %p664 = pneg %p191
        $region50: #{tpu_custom_call.1} parent=47 // pred_check_branch
          %666 = sbr.rel (%p664) target = $region52
        $region51: #{tpu_custom_call.1} parent=47 // pred_region
          %s668 = ssub.s32 32, 32
          %669 = vsyncadd %s660, %s668
          %s670 = smul.addr %s21, 32
          %s671 = scalar_lea.hbm %s7, %s670
          %s673 = sshll.u32 %s663, 4
          %s674 = int_to_ptr.vmem [resolvable:$true] %s673
          %676 = dma.vmem_to_hbm [thread:$0]  %s674, 32, %s671, %s660
        $region52: #{tpu_custom_call.1} parent=47 // pred_fallthru
          _
      $region48: #{tpu_custom_call.1} parent=5 // pred_fallthru
        _
      %p677 = scmp.le.s32.totalorder 2, %s16
      // Predicated region
      $region53: #{tpu_custom_call.1} parent=5 // pred_check
        %p678 = pneg %p677
      $region54: #{tpu_custom_call.1} parent=5 // pred_check_branch
        %680 = sbr.rel (%p678) target = $region56
      $region55: #{tpu_custom_call.1} parent=5 // pred_region
        %s681 = ssub.s32 %s16, 2
        // Predicated region
        $region57: #{tpu_custom_call.1} parent=55 // pred_check
          %p682 = pneg %p197
        $region58: #{tpu_custom_call.1} parent=55 // pred_check_branch
          %684 = sbr.rel (%p682) target = $region60
        $region59: #{tpu_custom_call.1} parent=55 // pred_region
          %s685 = sand.u32 %s182, 1
          %s686 = scalar_lea.sflag [#allocation3], %s685
          %s687 = sand.u32 %s182, 1
          %s688 = smul.addr %s687, 2
          %s689 = scalar_lea.vmem [#allocation2], %s688
          %690 = dma.done %s686, 32
        $region60: #{tpu_custom_call.1} parent=55 // pred_fallthru
          _
      $region56: #{tpu_custom_call.1} parent=5 // pred_fallthru
        _
    $region6: #{tpu_custom_call.1} parent=1 // loop_footer
      %s20 = sadd.s32 1, %s16
    $region7: #{tpu_custom_call.1} parent=1 // loop_footer_branch
      %15 = sbr.rel target = $region3
    $region8: #{tpu_custom_call.1} parent=1 // loop_exit
      _
    %691 = vsyncpa [#allocation3], 1
    %s692 = scalar_lea.sflag [#allocation3], 1
    %693 = vsyncpa %s692, 1

</llo_original>
